<compile_context>
chip_gen: v6e
topology: v6e:2x2x1
jax: 0.10.0
libtpu: 0.0.40
codegen_flags: <defaults>
</compile_context>

<pallas_src>
import math

import jax
import jax.numpy as jnp
from jax.experimental import pallas as pl
from jax.experimental.pallas import tpu as pltpu


def _round_up(x, m):
    return ((x + m - 1) // m) * m


def _vmem_capacity_bytes():
    """Physical VMEM per TensorCore if discoverable, else a conservative 64 MiB."""
    try:
        info = pltpu.get_tpu_info()
        for name in ("vmem_capacity_bytes", "vmem_bytes", "vmem_size_bytes"):
            v = getattr(info, name, None)
            if v:
                return int(v)
    except Exception:
        pass
    return 64 * 1024 * 1024


def _choose_time_tile(T, B, H, C, in_isz, mxu_isz, budget_cap, target_rows,
                      prefer_two_steps):
    """Pick the time-tile TT (last dim of the input block: multiple of 128 or full)."""
    if T <= 128:
        return T                                   # one full-extent block
    tt_max = (T // 128) * 128
    tt = min(tt_max, max(128, (target_rows // max(B, 1)) // 128 * 128))

    def tile_bytes(tt_):
        rows = tt_ * B
        return (2 * B * H * tt_ * in_isz           # framewise input blocks (double-buffered)
                + 2 * rows * H * in_isz            # visual_features output blocks
                + 2 * rows * C * 4                 # f32 logits output blocks
                + H * C * mxu_isz                  # weight: constant index_map -> resident once
                + C * 4)                           # reciprocal column norms

    while tt > 128 and tile_bytes(tt) > budget_cap:
        tt -= 128

    # v7x has two TensorCores; a single-step 'parallel' grid leaves one idle.
    if prefer_two_steps and -(-T // tt) < 2 and tt > 128:
        tt = max(128, (tt // 2) // 128 * 128)
    return tt


def slr_head(framewise_bht, weight, *, mxu_dtype=jnp.bfloat16):
    """Fused (B,H,T)->(T,B,H) transpose + NormLinear classifier.

    Returns:
      visual_features: (T, B, H) in the input dtype (exact transpose copy),
      logits:          (T, B, C) float32, x @ normalize(weight, dim=0).
    """
    B, H, T = framewise_bht.shape
    H_w, C = weight.shape
    assert H == H_w

    in_dtype = framewise_bht.dtype
    in_isz = jnp.dtype(in_dtype).itemsize
    mxu_isz = jnp.dtype(mxu_dtype).itemsize

    # F.normalize(weight, dim=0) folded into the matmul epilogue: a tiny (1, C)
    # f32 reciprocal-norm row computed once from the *raw* f32 weight, so the
    # bf16 quantization only touches the raw weight, never the normalized one.
    w_f32 = weight.astype(jnp.float32)
    inv_norm = 1.0 / jnp.maximum(
        jnp.sqrt(jnp.sum(w_f32 * w_f32, axis=0, keepdims=True)), 1e-12)
    w_mxu = weight.astype(mxu_dtype)

    # Generation-aware VMEM budgeting.
    vmem_phys = _vmem_capacity_bytes()
    if vmem_phys >= 100 * 1024 * 1024:            # v5e / v6e: 128 MiB physical
        budget_cap, vmem_limit, target_rows = 96 << 20, 110 << 20, 2048
        prefer_two_steps = False
    else:                                         # v7x: 64 MiB per TC, 2 TCs/chip
        budget_cap, vmem_limit, target_rows = 26 << 20, 48 << 20, 512
        prefer_two_steps = True

    # TODO(synk): if hidden_size grows to >=4K (or C becomes huge), add a K grid
    #             axis over H with an f32 VMEM accumulator instead of keeping the
    #             whole (H, C) weight block resident.
    TT = _choose_time_tile(T, B, H, C, in_isz, mxu_isz, budget_cap, target_rows,
                           prefer_two_steps)
    grid = (pl.cdiv(T, TT),)

    def kernel(x_ref, w_ref, inv_ref, vis_ref, log_ref):
        w = w_ref[...]                                 # (H, C) mxu dtype, resident
        inv_n = inv_ref[...]                           # (1, C) f32
        # Batched minor-dims transpose (B, H, TT) -> (B, TT, H): XLU work that
        # hides under the MXU matmuls below.
        xt = jnp.swapaxes(x_ref[...], 1, 2)
        for b in range(B):                             # B is small; static unroll
            xb_t = xt[b]                               # (TT, H), input dtype
            vis_ref[:, b, :] = xb_t
            acc = jnp.dot(xb_t.astype(mxu_dtype), w,
                          preferred_element_type=jnp.float32)   # (TT, C) f32
            log_ref[:, b, :] = (acc * inv_n).astype(log_ref.dtype)

    cost = pl.CostEstimate(
        flops=2 * T * B * H * C,
        transcendentals=0,
        bytes_accessed=(T * B * H * in_isz            # framewise read
                        + H * C * mxu_isz             # weight read
                        + C * 4                       # inv-norm read
                        + T * B * H * in_isz          # visual_features write
                        + T * B * C * 4),             # logits write
    )

    vis, logits = pl.pallas_call(
        kernel,
        out_shape=(
            jax.ShapeDtypeStruct((T, B, H), in_dtype),
            jax.ShapeDtypeStruct((T, B, C), jnp.float32),
        ),
        grid=grid,
        in_specs=[
            pl.BlockSpec((B, H, TT), lambda i: (0, 0, i)),
            pl.BlockSpec((H, C), lambda i: (0, 0)),
            pl.BlockSpec((1, C), lambda i: (0, 0)),
        ],
        out_specs=(
            pl.BlockSpec((TT, B, H), lambda i: (i, 0, 0)),
            pl.BlockSpec((TT, B, C), lambda i: (i, 0, 0)),
        ),
        compiler_params=pltpu.CompilerParams(
            dimension_semantics=("parallel",),
            vmem_limit_bytes=vmem_limit,
        ),
        cost_estimate=cost,
    )(framewise_bht, w_mxu, inv_norm)

    return vis, logits


# ----------------------------------------------------------------------------
# Parameter init (deterministic, mirrors NormLinear.__init__)
# ----------------------------------------------------------------------------
def init_norm_linear_weight(key, in_dim, out_dim):
    # nn.init.xavier_uniform_(gain=calculate_gain('relu')) == sqrt(2) gain.
    gain = math.sqrt(2.0)
    bound = gain * math.sqrt(6.0 / (in_dim + out_dim))
    return jax.random.uniform(
        key, (in_dim, out_dim), dtype=jnp.float32, minval=-bound, maxval=bound
    )


# ----------------------------------------------------------------------------
# SLRModel forward (3-D framewise-input path of the reference forward())
# ----------------------------------------------------------------------------
def slr_forward(framewise_bht, len_x, classifier_weight):
    """
    framewise_bht: (B, H, T) framewise features (len(x.shape) != 5 path,
                   so `framewise = x` in the reference code).
    len_x:         (B,) int32 sequence lengths.
    classifier_weight: (H, num_classes) shared NormLinear weight
                   (share_classifier=True => conv1d.fc is self.classifier).
    """
    # TODO(synk): self.conv2d (ResNet backbone) and self.conv1d (TemporalConv)
    #             are external, undefined submodules; only the 3-D framewise
    #             path (framewise = x) is reproduced and feat_len = len_x.
    # TODO(synk): self.temporal_model (BiLSTMLayer) is undefined in the source
    #             file; its predictions are substituted by the visual features,
    #             which makes conv1d.fc(visual_feat) and classifier(predictions)
    #             byte-identical work here -> compute once and alias.  When the
    #             real temporal model is plugged in, issue a second slr_head-
    #             style NormLinear call on its (T, B, H) predictions.
    visual_feat, sequence_logits = slr_head(framewise_bht, classifier_weight)
    conv_logits = sequence_logits
    feat_len = len_x

    # TODO(synk): self.decoder (beam-search Decode) has no Pallas equivalent;
    #             returning None as in training mode.
    return {
        "visual_features": visual_feat,
        "feat_len": feat_len,
        "conv_logits": conv_logits,
        "sequence_logits": sequence_logits,
        "conv_sents": None,
        "recognized_sents": None,
    }


if __name__ == "__main__":
    key = jax.random.PRNGKey(0)
    k_x, k_w = jax.random.split(key)

    B, H, T = 2, 32, 8          # batch, hidden_size, temporal length
    num_classes = 16

    framewise = jax.random.normal(k_x, (B, H, T), dtype=jnp.float32)
    len_x = jnp.array([T, T], dtype=jnp.int32)
    w_cls = init_norm_linear_weight(k_w, H, num_classes)

    out = slr_forward(framewise, len_x, w_cls)
    jax.block_until_ready(out["visual_features"])
    jax.block_until_ready(out["sequence_logits"])
    jax.block_until_ready(out["conv_logits"])

    assert out["visual_features"].shape == (T, B, H)
    assert out["sequence_logits"].shape == (T, B, num_classes)
    assert out["conv_logits"].shape == (T, B, num_classes)

    # References.
    xt_ref = jnp.transpose(framewise, (2, 0, 1))                        # (T, B, H)
    inv_n = 1.0 / jnp.maximum(
        jnp.sqrt(jnp.sum(w_cls * w_cls, axis=0, keepdims=True)), 1e-12)  # (1, C)
    # Exact transpose pass-through for visual_features.
    assert bool(jnp.all(out["visual_features"] == xt_ref))
    # Tight check vs. an identically-quantized (bf16 operands, f32 acc) reference.
    ref_bf16 = jnp.einsum(
        "tbh,hc->tbc",
        xt_ref.astype(jnp.bfloat16), w_cls.astype(jnp.bfloat16),
        preferred_element_type=jnp.float32) * inv_n
    assert jnp.allclose(out["sequence_logits"], ref_bf16, atol=1e-3, rtol=1e-3)
    # Coarse check vs. the full-precision NormLinear reference.
    ref_f32 = jnp.einsum("tbh,hc->tbc", xt_ref, w_cls) * inv_n
    assert jnp.allclose(out["sequence_logits"], ref_f32, atol=5e-2, rtol=5e-2)
    assert jnp.allclose(out["conv_logits"], ref_bf16, atol=1e-3, rtol=1e-3)

    print("KERNEL_OK")
</pallas_src>

<mosaic_0001>
module attributes {stable_mosaic.version = 11 : i64} {
  func.func @kernel(%arg0: i32, %arg1: memref<2x32x8xf32, #tpu.memory_space<vmem>>, %arg2: memref<32x16xbf16, #tpu.memory_space<vmem>>, %arg3: memref<1x16xf32, #tpu.memory_space<vmem>>, %arg4: memref<8x2x32xf32, #tpu.memory_space<vmem>>, %arg5: memref<8x2x16xf32, #tpu.memory_space<vmem>>) attributes {dimension_semantics = [#tpu.dimension_semantics<parallel>], iteration_bounds = array<i64: 1>, scalar_prefetch = 0 : i64, scratch_operands = 0 : i64, tpu.core_type = #tpu.core_type<tc>, window_params = [{transform_indices = @transform_0, window_bounds = array<i64: 2, 32, 8>}, {pipeline_mode = #tpu.pipeline_mode<synchronous>, transform_indices = @transform_1, window_bounds = array<i64: 32, 16>}, {pipeline_mode = #tpu.pipeline_mode<synchronous>, transform_indices = @transform_2, window_bounds = array<i64: 1, 16>}, {transform_indices = @transform_3, window_bounds = array<i64: 8, 2, 32>}, {transform_indices = @transform_4, window_bounds = array<i64: 8, 2, 16>}]} {
    %c0 = arith.constant 0 : index
    %c0_0 = arith.constant 0 : index
    %0 = vector.load %arg2[%c0, %c0_0] : memref<32x16xbf16, #tpu.memory_space<vmem>>, vector<32x16xbf16>
    %c0_1 = arith.constant 0 : index
    %c0_2 = arith.constant 0 : index
    %1 = vector.load %arg3[%c0_1, %c0_2] : memref<1x16xf32, #tpu.memory_space<vmem>>, vector<1x16xf32>
    %c0_3 = arith.constant 0 : index
    %c0_4 = arith.constant 0 : index
    %c0_5 = arith.constant 0 : index
    %2 = vector.load %arg1[%c0_3, %c0_4, %c0_5] : memref<2x32x8xf32, #tpu.memory_space<vmem>>, vector<2x32x8xf32>
    %3 = tpu.transpose %2, [0, 2, 1] : vector<2x32x8xf32> -> vector<2x8x32xf32>
    %4 = vector.extract_strided_slice %3 {offsets = [0, 0, 0], sizes = [1, 8, 32], strides = [1, 1, 1]} : vector<2x8x32xf32> to vector<1x8x32xf32>
    %5 = vector.shape_cast %4 : vector<1x8x32xf32> to vector<8x32xf32>
    %c0_6 = arith.constant 0 : index
    %c0_7 = arith.constant 0 : index
    %c0_8 = arith.constant 0 : index
    %6 = vector.load %arg4[%c0_6, %c0_7, %c0_8] : memref<8x2x32xf32, #tpu.memory_space<vmem>>, vector<8x1x32xf32>
    %7 = vector.shape_cast %6 : vector<8x1x32xf32> to vector<8x32xf32>
    %8 = vector.shape_cast %5 : vector<8x32xf32> to vector<8x1x32xf32>
    tpu.vector_store %arg4[%c0_6, %c0_7, %c0_8], %8 {strides = array<i32>} : memref<8x2x32xf32, #tpu.memory_space<vmem>>, vector<8x1x32xf32>,
    %9 = arith.truncf %5 : vector<8x32xf32> to vector<8x32xbf16>
    %cst = arith.constant dense<0.000000e+00> : vector<8x16xf32>
    %10 = tpu.matmul %9, %0, %cst {dimension_numbers = #tpu.dot_dimension_numbers<[1], [0], [0], [1], [0, 0, 1, 1], [], []>} : vector<8x32xbf16>, vector<32x16xbf16>, vector<8x16xf32> -> vector<8x16xf32>
    %11 = vector.broadcast %1 : vector<1x16xf32> to vector<8x16xf32>
    %12 = arith.mulf %10, %11 : vector<8x16xf32>
    %c0_9 = arith.constant 0 : index
    %c0_10 = arith.constant 0 : index
    %c0_11 = arith.constant 0 : index
    %13 = vector.load %arg5[%c0_9, %c0_10, %c0_11] : memref<8x2x16xf32, #tpu.memory_space<vmem>>, vector<8x1x16xf32>
    %14 = vector.shape_cast %13 : vector<8x1x16xf32> to vector<8x16xf32>
    %15 = vector.shape_cast %12 : vector<8x16xf32> to vector<8x1x16xf32>
    tpu.vector_store %arg5[%c0_9, %c0_10, %c0_11], %15 {strides = array<i32>} : memref<8x2x16xf32, #tpu.memory_space<vmem>>, vector<8x1x16xf32>,
    %16 = vector.extract_strided_slice %3 {offsets = [1, 0, 0], sizes = [1, 8, 32], strides = [1, 1, 1]} : vector<2x8x32xf32> to vector<1x8x32xf32>
    %17 = vector.shape_cast %16 : vector<1x8x32xf32> to vector<8x32xf32>
    %c0_12 = arith.constant 0 : index
    %c1 = arith.constant 1 : index
    %c0_13 = arith.constant 0 : index
    %18 = vector.load %arg4[%c0_12, %c1, %c0_13] : memref<8x2x32xf32, #tpu.memory_space<vmem>>, vector<8x1x32xf32>
    %19 = vector.shape_cast %18 : vector<8x1x32xf32> to vector<8x32xf32>
    %20 = vector.shape_cast %17 : vector<8x32xf32> to vector<8x1x32xf32>
    tpu.vector_store %arg4[%c0_12, %c1, %c0_13], %20 {strides = array<i32>} : memref<8x2x32xf32, #tpu.memory_space<vmem>>, vector<8x1x32xf32>,
    %21 = arith.truncf %17 : vector<8x32xf32> to vector<8x32xbf16>
    %cst_14 = arith.constant dense<0.000000e+00> : vector<8x16xf32>
    %22 = tpu.matmul %21, %0, %cst_14 {dimension_numbers = #tpu.dot_dimension_numbers<[1], [0], [0], [1], [0, 0, 1, 1], [], []>} : vector<8x32xbf16>, vector<32x16xbf16>, vector<8x16xf32> -> vector<8x16xf32>
    %23 = vector.broadcast %1 : vector<1x16xf32> to vector<8x16xf32>
    %24 = arith.mulf %22, %23 : vector<8x16xf32>
    %c0_15 = arith.constant 0 : index
    %c1_16 = arith.constant 1 : index
    %c0_17 = arith.constant 0 : index
    %25 = vector.load %arg5[%c0_15, %c1_16, %c0_17] : memref<8x2x16xf32, #tpu.memory_space<vmem>>, vector<8x1x16xf32>
    %26 = vector.shape_cast %25 : vector<8x1x16xf32> to vector<8x16xf32>
    %27 = vector.shape_cast %24 : vector<8x16xf32> to vector<8x1x16xf32>
    tpu.vector_store %arg5[%c0_15, %c1_16, %c0_17], %27 {strides = array<i32>} : memref<8x2x16xf32, #tpu.memory_space<vmem>>, vector<8x1x16xf32>,
    return
  }
  func.func @transform_0(%arg0: i32) -> (i32, i32, i32) {
    %c0_i32 = arith.constant 0 : i32
    %c0_i32_0 = arith.constant 0 : i32
    %c0_i32_1 = arith.constant 0 : i32
    return %c0_i32, %c0_i32_0, %arg0 : i32, i32, i32
  }
  func.func @transform_1(%arg0: i32) -> (i32, i32) {
    %c0_i32 = arith.constant 0 : i32
    %c0_i32_0 = arith.constant 0 : i32
    %c0_i32_1 = arith.constant 0 : i32
    return %c0_i32, %c0_i32_0 : i32, i32
  }
  func.func @transform_2(%arg0: i32) -> (i32, i32) {
    %c0_i32 = arith.constant 0 : i32
    %c0_i32_0 = arith.constant 0 : i32
    %c0_i32_1 = arith.constant 0 : i32
    return %c0_i32, %c0_i32_0 : i32, i32
  }
  func.func @transform_3(%arg0: i32) -> (i32, i32, i32) {
    %c0_i32 = arith.constant 0 : i32
    %c0_i32_0 = arith.constant 0 : i32
    %c0_i32_1 = arith.constant 0 : i32
    return %arg0, %c0_i32, %c0_i32_0 : i32, i32, i32
  }
  func.func @transform_4(%arg0: i32) -> (i32, i32, i32) {
    %c0_i32 = arith.constant 0 : i32
    %c0_i32_0 = arith.constant 0 : i32
    %c0_i32_1 = arith.constant 0 : i32
    return %arg0, %c0_i32, %c0_i32_0 : i32, i32, i32
  }
}

</mosaic_0001>

<llo_original>
// kernel: tpu_custom_call.1
$region0: #{tpu_custom_call.1}
  #allocation0 [shape = 'u32[]', space=smem, size = 0x4, offset = 0x4, fixed_abs, tag = 'smem constant byte address 0x4 - core index']
  #allocation1 [shape = 'u32[144,128]{1,0:T(1,128)}', space=vmem, size = 0x12000, scoped, tag = 'internal scratch']
  %s0 = inlined_call_operand.vmem [shape: f32[2,32,8], index: 0, kind: input, shape index: {}]
  %s1 = inlined_call_operand.vmem [shape: bf16[32,16], index: 1, kind: input, shape index: {}]
  %s2 = inlined_call_operand.vmem [shape: f32[1,16], index: 2, kind: input, shape index: {}]
  %s3 = inlined_call_operand.hbm [shape: f32[8,2,32], index: 3, kind: output, shape index: {0}]
  %s4 = inlined_call_operand.hbm [shape: f32[8,2,16], index: 4, kind: output, shape index: {1}]
  %5 = xla_tuple %s3, %s4
  %s6 = sld [smem:[#allocation0]]
  $region30: #{tpu_custom_call.1} parent=0
    _
  %s8 = ssub.s32 1, %s6
  %s9 = scalar_select 0, %s8, %s6
  $region1: #{tpu_custom_call.1} parent=0
    #allocation2 [shape = 'u8[8192]{0}', space=vmem, size = 0x2000, scoped, tag = 'output window, operand 0, single buffered']
    #allocation3 [shape = 's32[1]{0}', space=sflag, size = 0x4, scoped, tag = 'scoped memory for tpu_custom_call.1']
    #allocation4 [shape = 'u8[8192]{0}', space=vmem, size = 0x2000, scoped, tag = 'output window, operand 1, single buffered']
    #allocation5 [shape = 's32[1]{0}', space=sflag, size = 0x4, scoped, tag = 'scoped memory for tpu_custom_call.1']
    %10 = vsyncpa [#allocation3], 0
    %11 = vsyncpa [#allocation5], 0
    // Predicated region
    $region2: #{tpu_custom_call.1} parent=1 // pred_check
      _
    $region3: #{tpu_custom_call.1} parent=1 // pred_check_branch
      %13 = sbr.rel (0) target = $region5
    $region4: #{tpu_custom_call.1} parent=1 // pred_region
      _
    $region5: #{tpu_custom_call.1} parent=1 // pred_fallthru
      _
    // Predicated region
    $region6: #{tpu_custom_call.1} parent=1 // pred_check
      _
    $region7: #{tpu_custom_call.1} parent=1 // pred_check_branch
      %15 = sbr.rel (0) target = $region9
    $region8: #{tpu_custom_call.1} parent=1 // pred_region
      _
    $region9: #{tpu_custom_call.1} parent=1 // pred_fallthru
      _
    // Predicated region
    $region10: #{tpu_custom_call.1} parent=1 // pred_check
      _
    $region11: #{tpu_custom_call.1} parent=1 // pred_check_branch
      %17 = sbr.rel (0) target = $region13
    $region12: #{tpu_custom_call.1} parent=1 // pred_region
      _
    $region13: #{tpu_custom_call.1} parent=1 // pred_fallthru
      _
    %v19 = vld [vmem:[%s1] sm:$0xf]
    %v20 = vld [vmem:[%s1 + $0x4] sm:$0xf]
    %v21 = vld [vmem:[%s1 + $0x8] sm:$0xf]
    %v22 = vld [vmem:[%s1 + $0xc] sm:$0xf]
    %v23 = vld [vmem:[%s2] sm:$0x1]
    %v24 = vld [vmem:[%s0] sm:$0xff]
    %v25 = vld [vmem:[%s0 + $0x8] sm:$0xff]
    %v26 = vld [vmem:[%s0 + $0x10] sm:$0xff]
    %v27 = vld [vmem:[%s0 + $0x18] sm:$0xff]
    %v28 = vld [vmem:[%s0 + $0x20] sm:$0xff]
    %v29 = vld [vmem:[%s0 + $0x28] sm:$0xff]
    %v30 = vld [vmem:[%s0 + $0x30] sm:$0xff]
    %v31 = vld [vmem:[%s0 + $0x38] sm:$0xff]
    %32 = vxpose.xlu0.b32.start [1/16] %v24, 128
    %33 = vxpose.xlu0.b32.cont [2/16] %v25, 128
    %34 = vxpose.xlu0.b32.cont [3/16] %v26, 128
    %35 = vxpose.xlu0.b32.cont [4/16] %v27, 128
    %36 = vxpose.xlu0.b32.cont [5/16] 0.0, 128
    %37 = vxpose.xlu0.b32.cont [6/16] 0.0, 128
    %38 = vxpose.xlu0.b32.cont [7/16] 0.0, 128
    %39 = vxpose.xlu0.b32.cont [8/16] 0.0, 128
    %40 = vxpose.xlu0.b32.cont [9/16] 0.0, 128
    %41 = vxpose.xlu0.b32.cont [10/16] 0.0, 128
    %42 = vxpose.xlu0.b32.cont [11/16] 0.0, 128
    %43 = vxpose.xlu0.b32.cont [12/16] 0.0, 128
    %44 = vxpose.xlu0.b32.cont [13/16] 0.0, 128
    %45 = vxpose.xlu0.b32.cont [14/16] 0.0, 128
    %46 = vxpose.xlu0.b32.cont [15/16] 0.0, 128
    %47 = vxpose.xlu0.b32.end [16/16] 0.0, 128
    %v48 = vpop.trf.xlu0
    %v49 = vpop.trf.xlu0
    %v50 = vpop.trf.xlu0
    %v51 = vpop.trf.xlu0
    %v52 = vpop.trf.xlu0
    %v53 = vpop.trf.xlu0
    %v54 = vpop.trf.xlu0
    %v55 = vpop.trf.xlu0
    %v56 = vpop.trf.xlu0
    %v57 = vpop.trf.xlu0
    %v58 = vpop.trf.xlu0
    %v59 = vpop.trf.xlu0
    %v60 = vpop.trf.xlu0
    %v61 = vpop.trf.xlu0
    %v62 = vpop.trf.xlu0
    %v63 = vpop.trf.xlu0
    %64 = vxpose.xlu0.b32.start [1/16] %v28, 128
    %65 = vxpose.xlu0.b32.cont [2/16] %v29, 128
    %66 = vxpose.xlu0.b32.cont [3/16] %v30, 128
    %67 = vxpose.xlu0.b32.cont [4/16] %v31, 128
    %68 = vxpose.xlu0.b32.cont [5/16] 0.0, 128
    %69 = vxpose.xlu0.b32.cont [6/16] 0.0, 128
    %70 = vxpose.xlu0.b32.cont [7/16] 0.0, 128
    %71 = vxpose.xlu0.b32.cont [8/16] 0.0, 128
    %72 = vxpose.xlu0.b32.cont [9/16] 0.0, 128
    %73 = vxpose.xlu0.b32.cont [10/16] 0.0, 128
    %74 = vxpose.xlu0.b32.cont [11/16] 0.0, 128
    %75 = vxpose.xlu0.b32.cont [12/16] 0.0, 128
    %76 = vxpose.xlu0.b32.cont [13/16] 0.0, 128
    %77 = vxpose.xlu0.b32.cont [14/16] 0.0, 128
    %78 = vxpose.xlu0.b32.cont [15/16] 0.0, 128
    %79 = vxpose.xlu0.b32.end [16/16] 0.0, 128
    %v80 = vpop.trf.xlu0
    %v81 = vpop.trf.xlu0
    %v82 = vpop.trf.xlu0
    %v83 = vpop.trf.xlu0
    %v84 = vpop.trf.xlu0
    %v85 = vpop.trf.xlu0
    %v86 = vpop.trf.xlu0
    %v87 = vpop.trf.xlu0
    %v88 = vpop.trf.xlu0
    %v89 = vpop.trf.xlu0
    %v90 = vpop.trf.xlu0
    %v91 = vpop.trf.xlu0
    %v92 = vpop.trf.xlu0
    %v93 = vpop.trf.xlu0
    %v94 = vpop.trf.xlu0
    %v95 = vpop.trf.xlu0
    %v97 = vcombine.high %v48, %v48
    %v99 = vunpack.c.l.s4 1966171168
    %v100 = vunpack.c.0.s8 %v99
    %v101 = vlaneseq
    %v102 = vshrl.u32 %v101, 7
    %v103 = vsub.s32 %v100, %v102
    %v104 = vrot.slane %v48, %v103
    %v106 = vunpack.c.l.s4 1966171168
    %v107 = vunpack.c.0.s8 %v106
    %v108 = vlaneseq
    %v109 = vshrl.u32 %v108, 7
    %v110 = vsub.s32 %v107, %v109
    %v111 = vrot.slane %v97, %v110
    %v112 = vcombine.high %v104, %v104
    %v113 = vcombine.high %v111, %v111
    %v115 = vunpack.c.l.s4 1966171168
    %v116 = vunpack.c.0.s8 %v115
    %v117 = vlaneseq
    %v118 = vshrl.u32 %v117, 7
    %v119 = vsub.s32 %v116, %v118
    %v120 = vrot.slane %v104, %v119
    %v122 = vunpack.c.l.s4 1966171168
    %v123 = vunpack.c.0.s8 %v122
    %v124 = vlaneseq
    %v125 = vshrl.u32 %v124, 7
    %v126 = vsub.s32 %v123, %v125
    %v127 = vrot.slane %v111, %v126
    %v129 = vunpack.c.l.s4 1966171168
    %v130 = vunpack.c.0.s8 %v129
    %v131 = vlaneseq
    %v132 = vshrl.u32 %v131, 7
    %v133 = vsub.s32 %v130, %v132
    %v134 = vrot.slane %v112, %v133
    %v136 = vunpack.c.l.s4 1966171168
    %v137 = vunpack.c.0.s8 %v136
    %v138 = vlaneseq
    %v139 = vshrl.u32 %v138, 7
    %v140 = vsub.s32 %v137, %v139
    %v141 = vrot.slane %v113, %v140
    %v142 = vcombine.high %v120, %v120
    %v143 = vcombine.high %v127, %v127
    %v144 = vcombine.high %v134, %v134
    %v145 = vcombine.high %v141, %v141
    %vm154 = vcmask 253952
    %155 = vst.msk [vmem:[#allocation2] sm:$0x1] %vm154, %v120
    %156 = vst.msk [vmem:[#allocation2 + $0x2] sm:$0x1] %vm154, %v134
    %157 = vst.msk [vmem:[#allocation2 + $0x4] sm:$0x1] %vm154, %v142
    %158 = vst.msk [vmem:[#allocation2 + $0x6] sm:$0x1] %vm154, %v144
    %159 = vst.msk [vmem:[#allocation2 + $0x8] sm:$0x1] %vm154, %v127
    %160 = vst.msk [vmem:[#allocation2 + $0xa] sm:$0x1] %vm154, %v141
    %161 = vst.msk [vmem:[#allocation2 + $0xc] sm:$0x1] %vm154, %v143
    %162 = vst.msk [vmem:[#allocation2 + $0xe] sm:$0x1] %vm154, %v145
    %v163 = vpack.c.bf16 %v48, %v48
    %v168 = vunpack.c.l.b16 %v19
    %v169 = vunpack.c.l.b16 %v20
    %v170 = vunpack.c.l.b16 %v21
    %v171 = vunpack.c.l.b16 %v22
    %v172 = vpack.c.b16 %v169, %v168
    %v173 = vpack.c.b16 %v171, %v170
    %vm176 = vcmask 261120
    %v178 = vsel %vm176, %v163, 0
    %180 = vmatprep.subr.bf16.mxu0 0
    %181 = vmatpush1.bf16.msra.mxu0 0
    %182 = vmatprep.subr.bf16.mxu0 0
    %183 = vmatpush1.bf16.msra.mxu0 0
    %184 = vmatprep.subr.bf16.mxu0 0
    %185 = vmatpush1.bf16.msra.mxu0 0
    %186 = vmatprep.subr.bf16.mxu0 0
    %187 = vmatpush1.bf16.msra.mxu0 0
    %188 = vmatprep.subr.bf16.mxu0 0
    %189 = vmatpush1.bf16.msra.mxu0 0
    %190 = vmatprep.subr.bf16.mxu0 0
    %191 = vmatpush1.bf16.msra.mxu0 0
    %192 = vmatprep.subr.bf16.mxu0 0
    %193 = vmatpush1.bf16.msra.mxu0 %v173
    %194 = vmatprep.subr.bf16.mxu0 0
    %195 = vmatpush1.bf16.msra.mxu0 %v172
    %196 = vmatprep.subr.bf16.mxu0 0
    %197 = vmatpush2.bf16.msra.mxu0 0
    %198 = vmatprep.subr.bf16.mxu0 0
    %199 = vmatpush2.bf16.msra.mxu0 0
    %200 = vmatprep.subr.bf16.mxu0 0
    %201 = vmatpush2.bf16.msra.mxu0 0
    %202 = vmatprep.subr.bf16.mxu0 0
    %203 = vmatpush2.bf16.msra.mxu0 0
    %204 = vmatprep.subr.bf16.mxu0 0
    %205 = vmatpush2.bf16.msra.mxu0 0
    %206 = vmatprep.subr.bf16.mxu0 0
    %207 = vmatpush2.bf16.msra.mxu0 0
    %208 = vmatprep.subr.bf16.mxu0 0
    %209 = vmatpush2.bf16.msra.mxu0 0
    %210 = vmatprep.subr.bf16.mxu0 0
    %211 = vmatpush2.bf16.msra.mxu0 0
    %212 = vmatprep.mubr.bf16.mxu0 0
    %213 = vmatmul.mubr.bf16.gmra.mxu0 %v178
    %v214 = vpop.f32.mrf.mxu0
    %v215 = vadd.f32 0.0, %v214
    %v216 = vpop.f32.mrf.mxu0
    %v217 = vpop.f32.mrf.mxu0
    %v218 = vpop.f32.mrf.mxu0
    %219 = vdwg.mxu0
    %v221 = vlaneseq
    %v222 = vshrl.u32 %v221, 7
    %v223 = vsub.s32 0, %v222
    %v224 = vrot.slane %v23, %v223
    %v226 = vmul.f32 %v215, %v224
    %v228 = vcombine.high %v226, %v226
    %v230 = vunpack.c.l.s4 1966171168
    %v231 = vunpack.c.0.s8 %v230
    %v232 = vlaneseq
    %v233 = vshrl.u32 %v232, 7
    %v234 = vsub.s32 %v231, %v233
    %v235 = vrot.slane %v226, %v234
    %v237 = vunpack.c.l.s4 1966171168
    %v238 = vunpack.c.0.s8 %v237
    %v239 = vlaneseq
    %v240 = vshrl.u32 %v239, 7
    %v241 = vsub.s32 %v238, %v240
    %v242 = vrot.slane %v228, %v241
    %v243 = vcombine.high %v235, %v235
    %v244 = vcombine.high %v242, %v242
    %v246 = vunpack.c.l.s4 1966171168
    %v247 = vunpack.c.0.s8 %v246
    %v248 = vlaneseq
    %v249 = vshrl.u32 %v248, 7
    %v250 = vsub.s32 %v247, %v249
    %v251 = vrot.slane %v235, %v250
    %v253 = vunpack.c.l.s4 1966171168
    %v254 = vunpack.c.0.s8 %v253
    %v255 = vlaneseq
    %v256 = vshrl.u32 %v255, 7
    %v257 = vsub.s32 %v254, %v256
    %v258 = vrot.slane %v242, %v257
    %v260 = vunpack.c.l.s4 1966171168
    %v261 = vunpack.c.0.s8 %v260
    %v262 = vlaneseq
    %v263 = vshrl.u32 %v262, 7
    %v264 = vsub.s32 %v261, %v263
    %v265 = vrot.slane %v243, %v264
    %v267 = vunpack.c.l.s4 1966171168
    %v268 = vunpack.c.0.s8 %v267
    %v269 = vlaneseq
    %v270 = vshrl.u32 %v269, 7
    %v271 = vsub.s32 %v268, %v270
    %v272 = vrot.slane %v244, %v271
    %v273 = vcombine.high %v251, %v251
    %v274 = vcombine.high %v258, %v258
    %v275 = vcombine.high %v265, %v265
    %v276 = vcombine.high %v272, %v272
    %vm285 = vcmask 122880
    %286 = vst.msk [vmem:[#allocation4] sm:$0x1] %vm285, %v251
    %287 = vst.msk [vmem:[#allocation4 + $0x2] sm:$0x1] %vm285, %v265
    %288 = vst.msk [vmem:[#allocation4 + $0x4] sm:$0x1] %vm285, %v273
    %289 = vst.msk [vmem:[#allocation4 + $0x6] sm:$0x1] %vm285, %v275
    %290 = vst.msk [vmem:[#allocation4 + $0x8] sm:$0x1] %vm285, %v258
    %291 = vst.msk [vmem:[#allocation4 + $0xa] sm:$0x1] %vm285, %v272
    %292 = vst.msk [vmem:[#allocation4 + $0xc] sm:$0x1] %vm285, %v274
    %293 = vst.msk [vmem:[#allocation4 + $0xe] sm:$0x1] %vm285, %v276
    %v295 = vcombine.high %v80, %v80
    %v297 = vunpack.c.l.s4 1966171168
    %v298 = vunpack.c.0.s8 %v297
    %v299 = vlaneseq
    %v300 = vshrl.u32 %v299, 7
    %v301 = vsub.s32 %v298, %v300
    %v302 = vrot.slane %v80, %v301
    %v304 = vunpack.c.l.s4 1966171168
    %v305 = vunpack.c.0.s8 %v304
    %v306 = vlaneseq
    %v307 = vshrl.u32 %v306, 7
    %v308 = vsub.s32 %v305, %v307
    %v309 = vrot.slane %v295, %v308
    %v310 = vcombine.high %v302, %v302
    %v311 = vcombine.high %v309, %v309
    %v313 = vunpack.c.l.s4 1966171168
    %v314 = vunpack.c.0.s8 %v313
    %v315 = vlaneseq
    %v316 = vshrl.u32 %v315, 7
    %v317 = vsub.s32 %v314, %v316
    %v318 = vrot.slane %v302, %v317
    %v320 = vunpack.c.l.s4 1966171168
    %v321 = vunpack.c.0.s8 %v320
    %v322 = vlaneseq
    %v323 = vshrl.u32 %v322, 7
    %v324 = vsub.s32 %v321, %v323
    %v325 = vrot.slane %v309, %v324
    %v327 = vunpack.c.l.s4 1966171168
    %v328 = vunpack.c.0.s8 %v327
    %v329 = vlaneseq
    %v330 = vshrl.u32 %v329, 7
    %v331 = vsub.s32 %v328, %v330
    %v332 = vrot.slane %v310, %v331
    %v334 = vunpack.c.l.s4 1966171168
    %v335 = vunpack.c.0.s8 %v334
    %v336 = vlaneseq
    %v337 = vshrl.u32 %v336, 7
    %v338 = vsub.s32 %v335, %v337
    %v339 = vrot.slane %v311, %v338
    %v340 = vcombine.high %v318, %v318
    %v341 = vcombine.high %v325, %v325
    %v342 = vcombine.high %v332, %v332
    %v343 = vcombine.high %v339, %v339
    %352 = vst.msk [vmem:[#allocation2 + $0x1] sm:$0x1] %vm154, %v318
    %353 = vst.msk [vmem:[#allocation2 + $0x3] sm:$0x1] %vm154, %v332
    %354 = vst.msk [vmem:[#allocation2 + $0x5] sm:$0x1] %vm154, %v340
    %355 = vst.msk [vmem:[#allocation2 + $0x7] sm:$0x1] %vm154, %v342
    %356 = vst.msk [vmem:[#allocation2 + $0x9] sm:$0x1] %vm154, %v325
    %357 = vst.msk [vmem:[#allocation2 + $0xb] sm:$0x1] %vm154, %v339
    %358 = vst.msk [vmem:[#allocation2 + $0xd] sm:$0x1] %vm154, %v341
    %359 = vst.msk [vmem:[#allocation2 + $0xf] sm:$0x1] %vm154, %v343
    %v360 = vpack.c.bf16 %v80, %v80
    %v362 = vsel %vm176, %v360, 0
    %364 = vmatprep.subr.bf16.mxu0 0
    %365 = vmatpush1.bf16.msra.mxu0 0
    %366 = vmatprep.subr.bf16.mxu0 0
    %367 = vmatpush1.bf16.msra.mxu0 0
    %368 = vmatprep.subr.bf16.mxu0 0
    %369 = vmatpush1.bf16.msra.mxu0 0
    %370 = vmatprep.subr.bf16.mxu0 0
    %371 = vmatpush1.bf16.msra.mxu0 0
    %372 = vmatprep.subr.bf16.mxu0 0
    %373 = vmatpush1.bf16.msra.mxu0 0
    %374 = vmatprep.subr.bf16.mxu0 0
    %375 = vmatpush1.bf16.msra.mxu0 0
    %376 = vmatprep.subr.bf16.mxu0 0
    %377 = vmatpush1.bf16.msra.mxu0 %v173
    %378 = vmatprep.subr.bf16.mxu0 0
    %379 = vmatpush1.bf16.msra.mxu0 %v172
    %380 = vmatprep.subr.bf16.mxu0 0
    %381 = vmatpush2.bf16.msra.mxu0 0
    %382 = vmatprep.subr.bf16.mxu0 0
    %383 = vmatpush2.bf16.msra.mxu0 0
    %384 = vmatprep.subr.bf16.mxu0 0
    %385 = vmatpush2.bf16.msra.mxu0 0
    %386 = vmatprep.subr.bf16.mxu0 0
    %387 = vmatpush2.bf16.msra.mxu0 0
    %388 = vmatprep.subr.bf16.mxu0 0
    %389 = vmatpush2.bf16.msra.mxu0 0
    %390 = vmatprep.subr.bf16.mxu0 0
    %391 = vmatpush2.bf16.msra.mxu0 0
    %392 = vmatprep.subr.bf16.mxu0 0
    %393 = vmatpush2.bf16.msra.mxu0 0
    %394 = vmatprep.subr.bf16.mxu0 0
    %395 = vmatpush2.bf16.msra.mxu0 0
    %396 = vmatprep.mubr.bf16.mxu0 0
    %397 = vmatmul.mubr.bf16.gmra.mxu0 %v362
    %v398 = vpop.f32.mrf.mxu0
    %v399 = vadd.f32 0.0, %v398
    %v400 = vpop.f32.mrf.mxu0
    %v401 = vpop.f32.mrf.mxu0
    %v402 = vpop.f32.mrf.mxu0
    %403 = vdwg.mxu0
    %v404 = vmul.f32 %v399, %v224
    %v406 = vcombine.high %v404, %v404
    %v408 = vunpack.c.l.s4 1966171168
    %v409 = vunpack.c.0.s8 %v408
    %v410 = vlaneseq
    %v411 = vshrl.u32 %v410, 7
    %v412 = vsub.s32 %v409, %v411
    %v413 = vrot.slane %v404, %v412
    %v415 = vunpack.c.l.s4 1966171168
    %v416 = vunpack.c.0.s8 %v415
    %v417 = vlaneseq
    %v418 = vshrl.u32 %v417, 7
    %v419 = vsub.s32 %v416, %v418
    %v420 = vrot.slane %v406, %v419
    %v421 = vcombine.high %v413, %v413
    %v422 = vcombine.high %v420, %v420
    %v424 = vunpack.c.l.s4 1966171168
    %v425 = vunpack.c.0.s8 %v424
    %v426 = vlaneseq
    %v427 = vshrl.u32 %v426, 7
    %v428 = vsub.s32 %v425, %v427
    %v429 = vrot.slane %v413, %v428
    %v431 = vunpack.c.l.s4 1966171168
    %v432 = vunpack.c.0.s8 %v431
    %v433 = vlaneseq
    %v434 = vshrl.u32 %v433, 7
    %v435 = vsub.s32 %v432, %v434
    %v436 = vrot.slane %v420, %v435
    %v438 = vunpack.c.l.s4 1966171168
    %v439 = vunpack.c.0.s8 %v438
    %v440 = vlaneseq
    %v441 = vshrl.u32 %v440, 7
    %v442 = vsub.s32 %v439, %v441
    %v443 = vrot.slane %v421, %v442
    %v445 = vunpack.c.l.s4 1966171168
    %v446 = vunpack.c.0.s8 %v445
    %v447 = vlaneseq
    %v448 = vshrl.u32 %v447, 7
    %v449 = vsub.s32 %v446, %v448
    %v450 = vrot.slane %v422, %v449
    %v451 = vcombine.high %v429, %v429
    %v452 = vcombine.high %v436, %v436
    %v453 = vcombine.high %v443, %v443
    %v454 = vcombine.high %v450, %v450
    %463 = vst.msk [vmem:[#allocation4 + $0x1] sm:$0x1] %vm285, %v429
    %464 = vst.msk [vmem:[#allocation4 + $0x3] sm:$0x1] %vm285, %v443
    %465 = vst.msk [vmem:[#allocation4 + $0x5] sm:$0x1] %vm285, %v451
    %466 = vst.msk [vmem:[#allocation4 + $0x7] sm:$0x1] %vm285, %v453
    %467 = vst.msk [vmem:[#allocation4 + $0x9] sm:$0x1] %vm285, %v436
    %468 = vst.msk [vmem:[#allocation4 + $0xb] sm:$0x1] %vm285, %v450
    %469 = vst.msk [vmem:[#allocation4 + $0xd] sm:$0x1] %vm285, %v452
    %470 = vst.msk [vmem:[#allocation4 + $0xf] sm:$0x1] %vm285, %v454
    // Predicated region
    $region14: #{tpu_custom_call.1} parent=1 // pred_check
      _
    $region15: #{tpu_custom_call.1} parent=1 // pred_check_branch
      %472 = sbr.rel (0) target = $region17
    $region16: #{tpu_custom_call.1} parent=1 // pred_region
      %s474 = ssub.s32 256, 256
      %475 = vsyncadd [#allocation3], %s474
      %s476 = sshll.u32 [#allocation2], 4
      %s477 = int_to_ptr.vmem [resolvable:$true] %s476
      %482 = dma.vmem_to_hbm [thread:$0]  %s477, 256, %s3, [#allocation3], 32, 32, 2
    $region17: #{tpu_custom_call.1} parent=1 // pred_fallthru
      _
    // Predicated region
    $region18: #{tpu_custom_call.1} parent=1 // pred_check
      _
    $region19: #{tpu_custom_call.1} parent=1 // pred_check_branch
      %484 = sbr.rel (0) target = $region21
    $region20: #{tpu_custom_call.1} parent=1 // pred_region
      %s486 = ssub.s32 256, 256
      %487 = vsyncadd [#allocation5], %s486
      %s488 = sshll.u32 [#allocation4], 4
      %s489 = int_to_ptr.vmem [resolvable:$true] %s488
      %494 = dma.vmem_to_hbm [thread:$0]  %s489, 256, %s4, [#allocation5], 32, 32, 2
    $region21: #{tpu_custom_call.1} parent=1 // pred_fallthru
      _
    // Predicated region
    $region22: #{tpu_custom_call.1} parent=1 // pred_check
      _
    $region23: #{tpu_custom_call.1} parent=1 // pred_check_branch
      %496 = sbr.rel (0) target = $region25
    $region24: #{tpu_custom_call.1} parent=1 // pred_region
      %497 = dma.done [#allocation3], 256
    $region25: #{tpu_custom_call.1} parent=1 // pred_fallthru
      _
    // Predicated region
    $region26: #{tpu_custom_call.1} parent=1 // pred_check
      _
    $region27: #{tpu_custom_call.1} parent=1 // pred_check_branch
      %499 = sbr.rel (0) target = $region29
    $region28: #{tpu_custom_call.1} parent=1 // pred_region
      %500 = dma.done [#allocation5], 256
    $region29: #{tpu_custom_call.1} parent=1 // pred_fallthru
      _
    %501 = vsyncpa [#allocation3], 1
    %502 = vsyncpa [#allocation5], 1

</llo_original>
